<compile_context>
chip_gen: v7x
topology: tpu7x:2x2x1
jax: 0.10.0
libtpu: 0.0.40
codegen_flags: <defaults>
</compile_context>

<pallas_src>
import jax
import jax.numpy as jnp
from jax.experimental import pallas as pl
from jax.experimental.pallas import tpu as pltpu

LEAKY_SLOPE = 0.01   # nn.LeakyReLU default negative_slope
BN_EPS = 1e-5        # nn.BatchNorm1d default eps
OUT_LANES = 128      # lane padding for the 1-wide output layer (MXU-friendly)


def _round_up(v: int, m: int) -> int:
    return ((v + m - 1) // m) * m


def _make_ffn_kernel(n_hidden: int):
    """Fused FFN kernel for `n_hidden` hidden layers.

    Ref order: x(bf16), [w_folded(bf16), b_folded(f32)] * n_hidden,
               w_out(bf16, padded to 128 lanes), b_out(f32, padded), out(f32, (1,1,tm)).
    x is a (tm, d) batch tile; all weights are whole-array, VMEM-resident blocks.
    """

    def kernel(*refs):
        x_ref = refs[0]
        out_ref = refs[-1]

        h = x_ref[...]                 # bf16 (tm, d) — already bf16 from the wrapper
        idx = 1
        for _ in range(n_hidden):
            w = refs[idx][...]         # bf16 (in, out), BN scale folded in
            b = refs[idx + 1][...]     # f32  (1, out),  BN shift folded in
            idx += 2
            # Linear (+ folded BatchNorm), f32 accumulation on the MXU
            z = jnp.dot(h, w, preferred_element_type=jnp.float32) + b
            # LeakyReLU: max(z, slope*z) (valid since slope < 1) — mul+max on the VPU
            z = jnp.maximum(z, LEAKY_SLOPE * z)
            # Dropout (eval) -> identity
            h = z.astype(jnp.bfloat16)

        w_out = refs[idx][...]         # bf16 (hidden_last, 128), zero-padded cols 1..127
        b_out = refs[idx + 1][...]     # f32  (1, 128), zero-padded
        z = jnp.dot(h, w_out, preferred_element_type=jnp.float32) + b_out   # (tm, 128)
        # Batch-in-lanes output: tile-aligned XLU transpose, keep only the real column.
        zt = jnp.transpose(z)          # (128, tm); tm is a multiple of 128
        row = zt[0:1, :]               # (1, tm)
        # Sigmoid: exp (EUP) + approx reciprocal (EUP), lane-dense (1, tm) store.
        sig = pl.reciprocal(1.0 + jnp.exp(-row), approx=True)
        out_ref[...] = sig.reshape(out_ref.shape)

    return kernel


def _vmem_limit_bytes() -> int:
    """Generation-aware VMEM allowance: ~112 MiB on v5e/v6e, ~48 MiB on v7x."""
    try:
        cap = int(pltpu.get_tpu_info().vmem_capacity_bytes)
    except Exception:
        cap = 64 * 1024 * 1024  # conservative default (v7x per-core VMEM)
    return max(16 * 1024 * 1024, min(cap - 16 * 1024 * 1024, 112 * 1024 * 1024))


def ffn_forward_pallas(x, params, *, batch_tile=1024):
    """params = (hidden_params, (w_out, b_out)); hidden_params is a list of
    (w, b, gamma, beta, running_mean, running_var) per hidden layer."""
    hidden_params, (w_out, b_out) = params
    n_hidden = len(hidden_params)
    n, d = x.shape

    # --- Parameter-time constant folding: BN(eval) into the Linear weight/bias ---
    flat_w = []
    dims = [d]
    for (w, b, gamma, beta, r_mean, r_var) in hidden_params:
        scale = gamma / jnp.sqrt(r_var + BN_EPS)
        shift = beta - r_mean * scale
        w_f = (w * scale[None, :]).astype(jnp.bfloat16)
        b_f = (b * scale + shift).astype(jnp.float32)
        flat_w += [w_f, b_f[None, :]]
        dims.append(w.shape[1])

    # Lane-padded output layer: (hidden_last, 1) -> (hidden_last, 128)
    h_last = w_out.shape[0]
    w_out_pad = (jnp.zeros((h_last, OUT_LANES), jnp.float32)
                 .at[:, 0].set(w_out[:, 0]).astype(jnp.bfloat16))
    b_out_pad = jnp.zeros((1, OUT_LANES), jnp.float32).at[0, 0].set(b_out[0])
    flat_w += [w_out_pad, b_out_pad]
    dims.append(OUT_LANES)
    max_dim = max(dims)

    # --- Batch tile: multiple of 128 (lane-dense transposed store), 256 when larger ---
    batch_tile = max(128, _round_up(int(batch_tile), 128))
    tm = min(batch_tile, _round_up(max(n, 1), 128))
    if tm > 128:
        tm = _round_up(tm, 256)
    # v7x megacore: prefer >= 2 grid steps when the batch is large enough to split.
    if n >= 512 and _round_up(n, tm) == tm:
        tm = max(256, min(tm, _round_up(pl.cdiv(n, 2), 256)))

    # --- Generation-aware VMEM budget; shrink tm if the estimate would not fit ---
    weight_bytes = sum(int(a.size) * a.dtype.itemsize for a in flat_w)

    def _need(tm_):
        return (2 * weight_bytes              # resident weights (assume double-buffered)
                + 2 * tm_ * d * 2             # bf16 x tile, double-buffered
                + 2 * tm_ * 4                 # (1,1,tm) f32 out tile, double-buffered
                + 6 * tm_ * max_dim * 4       # f32/bf16 activations + transpose headroom
                + (2 << 20))                  # Mosaic internal scratch slack

    vmem_limit = _vmem_limit_bytes()
    while tm > 128 and _need(tm) > vmem_limit:
        tm = max(128, _round_up(tm // 2, 128))

    n_pad = _round_up(max(n, 1), tm)
    grid_steps = n_pad // tm

    # Stream x at half width (bf16); pad the batch after the cast.
    x_p = x.astype(jnp.bfloat16)
    if n_pad != n:
        x_p = jnp.pad(x_p, ((0, n_pad - n), (0, 0)))

    in_specs = [pl.BlockSpec((tm, d), lambda i: (i, 0))]
    for arr in flat_w:
        # Constant index_map -> fetched once, stays VMEM-resident across batch tiles.
        in_specs.append(pl.BlockSpec(arr.shape, lambda i: (0, 0)))
    out_specs = pl.BlockSpec((1, 1, tm), lambda i: (i, 0, 0))

    kernel = _make_ffn_kernel(n_hidden)
    out = pl.pallas_call(
        kernel,
        out_shape=jax.ShapeDtypeStruct((grid_steps, 1, tm), jnp.float32),
        grid=(grid_steps,),
        in_specs=in_specs,
        out_specs=out_specs,
        compiler_params=pltpu.CompilerParams(
            dimension_semantics=("parallel",),
            vmem_limit_bytes=int(vmem_limit),
        ),
    )(x_p, *flat_w)

    # (grid, 1, tm) -> (n, 1): strip batch padding; negligible HBM traffic.
    return out.reshape(n_pad)[:n].reshape(n, 1)


def ffn_forward_ref(x, params):
    """Pure-JAX f32 reference (same eval-mode semantics as the PyTorch module)."""
    hidden_params, (w_out, b_out) = params
    h = x.astype(jnp.float32)
    for (w, b, gamma, beta, r_mean, r_var) in hidden_params:
        h = h @ w + b
        h = (h - r_mean) / jnp.sqrt(r_var + BN_EPS) * gamma + beta
        h = jnp.where(h >= 0.0, h, LEAKY_SLOPE * h)
    z = h @ w_out + b_out
    return jax.nn.sigmoid(z)


def init_params(key, data_dim, hidden_layers_dim):
    """Deterministic synthetic parameter init mirroring the module's shapes."""
    hidden_params = []
    in_dim = data_dim
    for h_dim in hidden_layers_dim:
        key, kw, kb, kg, kbt, km, kv = jax.random.split(key, 7)
        w = jax.random.normal(kw, (in_dim, h_dim), jnp.float32) * 0.1     # Linear weight (in, out)
        b = jax.random.normal(kb, (h_dim,), jnp.float32) * 0.1            # Linear bias
        gamma = 1.0 + 0.1 * jax.random.normal(kg, (h_dim,), jnp.float32)  # BN weight
        beta = 0.1 * jax.random.normal(kbt, (h_dim,), jnp.float32)        # BN bias
        r_mean = 0.1 * jax.random.normal(km, (h_dim,), jnp.float32)       # BN running_mean
        r_var = 1.0 + 0.1 * jnp.abs(jax.random.normal(kv, (h_dim,), jnp.float32))  # BN running_var
        hidden_params.append((w, b, gamma, beta, r_mean, r_var))
        in_dim = h_dim

    key, kw, kb = jax.random.split(key, 3)
    w_out = jax.random.normal(kw, (in_dim, 1), jnp.float32) * 0.1
    b_out = jax.random.normal(kb, (1,), jnp.float32) * 0.1
    return hidden_params, (w_out, b_out)


if __name__ == "__main__":
    key = jax.random.PRNGKey(0)
    key_x, key_p = jax.random.split(key)

    batch = 8
    data_dim = 16
    hidden_layers_dim = [32, 32]
    dropout_rate = 0.1  # eval mode -> no-op

    x = jax.random.normal(key_x, (batch, data_dim), jnp.float32)
    params = init_params(key_p, data_dim, hidden_layers_dim)

    out = ffn_forward_pallas(x, params)
    out = jax.block_until_ready(out)

    ref = ffn_forward_ref(x, params)
    assert out.shape == (batch, 1), out.shape
    # bf16 MXU inputs + approx reciprocal => compare at bf16-level tolerance.
    assert jnp.allclose(out, ref, atol=2e-2, rtol=2e-2), (out, ref)

    print("KERNEL_OK")
</pallas_src>

<mosaic_0001>
module attributes {stable_mosaic.version = 11 : i64} {
  func.func @kernel(%arg0: i32, %arg1: memref<128x16xbf16, #tpu.memory_space<vmem>>, %arg2: memref<16x32xbf16, #tpu.memory_space<vmem>>, %arg3: memref<1x32xf32, #tpu.memory_space<vmem>>, %arg4: memref<32x32xbf16, #tpu.memory_space<vmem>>, %arg5: memref<1x32xf32, #tpu.memory_space<vmem>>, %arg6: memref<32x128xbf16, #tpu.memory_space<vmem>>, %arg7: memref<1x128xf32, #tpu.memory_space<vmem>>, %arg8: memref<1x1x128xf32, #tpu.memory_space<vmem>>) attributes {dimension_semantics = [#tpu.dimension_semantics<parallel>], iteration_bounds = array<i64: 1>, scalar_prefetch = 0 : i64, scratch_operands = 0 : i64, tpu.core_type = #tpu.core_type<tc>, window_params = [{transform_indices = @transform_0, window_bounds = array<i64: 128, 16>}, {pipeline_mode = #tpu.pipeline_mode<synchronous>, transform_indices = @transform_1, window_bounds = array<i64: 16, 32>}, {pipeline_mode = #tpu.pipeline_mode<synchronous>, transform_indices = @transform_2, window_bounds = array<i64: 1, 32>}, {pipeline_mode = #tpu.pipeline_mode<synchronous>, transform_indices = @transform_3, window_bounds = array<i64: 32, 32>}, {pipeline_mode = #tpu.pipeline_mode<synchronous>, transform_indices = @transform_4, window_bounds = array<i64: 1, 32>}, {pipeline_mode = #tpu.pipeline_mode<synchronous>, transform_indices = @transform_5, window_bounds = array<i64: 32, 128>}, {pipeline_mode = #tpu.pipeline_mode<synchronous>, transform_indices = @transform_6, window_bounds = array<i64: 1, 128>}, {transform_indices = @transform_7, window_bounds = array<i64: 1, 1, 128>}]} {
    %c0 = arith.constant 0 : index
    %c0_0 = arith.constant 0 : index
    %0 = vector.load %arg1[%c0, %c0_0] : memref<128x16xbf16, #tpu.memory_space<vmem>>, vector<128x16xbf16>
    %c0_1 = arith.constant 0 : index
    %c0_2 = arith.constant 0 : index
    %1 = vector.load %arg2[%c0_1, %c0_2] : memref<16x32xbf16, #tpu.memory_space<vmem>>, vector<16x32xbf16>
    %c0_3 = arith.constant 0 : index
    %c0_4 = arith.constant 0 : index
    %2 = vector.load %arg3[%c0_3, %c0_4] : memref<1x32xf32, #tpu.memory_space<vmem>>, vector<1x32xf32>
    %cst = arith.constant dense<0.000000e+00> : vector<128x32xf32>
    %3 = tpu.matmul %0, %1, %cst {dimension_numbers = #tpu.dot_dimension_numbers<[1], [0], [0], [1], [0, 0, 1, 1], [], []>} : vector<128x16xbf16>, vector<16x32xbf16>, vector<128x32xf32> -> vector<128x32xf32>
    %4 = vector.broadcast %2 : vector<1x32xf32> to vector<128x32xf32>
    %5 = arith.addf %3, %4 : vector<128x32xf32>
    %cst_5 = arith.constant 0.00999999977 : f32
    %6 = vector.broadcast %cst_5 : f32 to vector<128x32xf32>
    %7 = arith.mulf %6, %5 : vector<128x32xf32>
    %8 = arith.maximumf %5, %7 : vector<128x32xf32>
    %9 = arith.truncf %8 : vector<128x32xf32> to vector<128x32xbf16>
    %c0_6 = arith.constant 0 : index
    %c0_7 = arith.constant 0 : index
    %10 = vector.load %arg4[%c0_6, %c0_7] : memref<32x32xbf16, #tpu.memory_space<vmem>>, vector<32x32xbf16>
    %c0_8 = arith.constant 0 : index
    %c0_9 = arith.constant 0 : index
    %11 = vector.load %arg5[%c0_8, %c0_9] : memref<1x32xf32, #tpu.memory_space<vmem>>, vector<1x32xf32>
    %cst_10 = arith.constant dense<0.000000e+00> : vector<128x32xf32>
    %12 = tpu.matmul %9, %10, %cst_10 {dimension_numbers = #tpu.dot_dimension_numbers<[1], [0], [0], [1], [0, 0, 1, 1], [], []>} : vector<128x32xbf16>, vector<32x32xbf16>, vector<128x32xf32> -> vector<128x32xf32>
    %13 = vector.broadcast %11 : vector<1x32xf32> to vector<128x32xf32>
    %14 = arith.addf %12, %13 : vector<128x32xf32>
    %cst_11 = arith.constant 0.00999999977 : f32
    %15 = vector.broadcast %cst_11 : f32 to vector<128x32xf32>
    %16 = arith.mulf %15, %14 : vector<128x32xf32>
    %17 = arith.maximumf %14, %16 : vector<128x32xf32>
    %18 = arith.truncf %17 : vector<128x32xf32> to vector<128x32xbf16>
    %c0_12 = arith.constant 0 : index
    %c0_13 = arith.constant 0 : index
    %19 = vector.load %arg6[%c0_12, %c0_13] : memref<32x128xbf16, #tpu.memory_space<vmem>>, vector<32x128xbf16>
    %c0_14 = arith.constant 0 : index
    %c0_15 = arith.constant 0 : index
    %20 = vector.load %arg7[%c0_14, %c0_15] : memref<1x128xf32, #tpu.memory_space<vmem>>, vector<1x128xf32>
    %cst_16 = arith.constant dense<0.000000e+00> : vector<128x128xf32>
    %21 = tpu.matmul %18, %19, %cst_16 {dimension_numbers = #tpu.dot_dimension_numbers<[1], [0], [0], [1], [0, 0, 1, 1], [], []>} : vector<128x32xbf16>, vector<32x128xbf16>, vector<128x128xf32> -> vector<128x128xf32>
    %22 = vector.broadcast %20 : vector<1x128xf32> to vector<128x128xf32>
    %23 = arith.addf %21, %22 : vector<128x128xf32>
    %24 = tpu.transpose %23, [1, 0] : vector<128x128xf32> -> vector<128x128xf32>
    %25 = vector.extract_strided_slice %24 {offsets = [0, 0], sizes = [1, 128], strides = [1, 1]} : vector<128x128xf32> to vector<1x128xf32>
    %cst_17 = arith.constant 0.000000e+00 : f32
    %26 = vector.broadcast %cst_17 : f32 to vector<1x128xf32>
    %27 = arith.subf %26, %25 : vector<1x128xf32>
    %28 = math.exp %27 : vector<1x128xf32>
    %cst_18 = arith.constant 1.000000e+00 : f32
    %29 = vector.broadcast %cst_18 : f32 to vector<1x128xf32>
    %30 = arith.addf %29, %28 : vector<1x128xf32>
    %31 = tpu.reciprocal %30 {approx = true} : vector<1x128xf32> -> vector<1x128xf32>
    %32 = vector.shape_cast %31 : vector<1x128xf32> to vector<1x1x128xf32>
    %c0_19 = arith.constant 0 : index
    %c0_20 = arith.constant 0 : index
    %c0_21 = arith.constant 0 : index
    %33 = vector.load %arg8[%c0_19, %c0_20, %c0_21] : memref<1x1x128xf32, #tpu.memory_space<vmem>>, vector<1x1x128xf32>
    tpu.vector_store %arg8[%c0_19, %c0_20, %c0_21], %32 {strides = array<i32>} : memref<1x1x128xf32, #tpu.memory_space<vmem>>, vector<1x1x128xf32>,
    return
  }
  func.func @transform_0(%arg0: i32) -> (i32, i32) {
    %c0_i32 = arith.constant 0 : i32
    %c0_i32_0 = arith.constant 0 : i32
    return %arg0, %c0_i32 : i32, i32
  }
  func.func @transform_1(%arg0: i32) -> (i32, i32) {
    %c0_i32 = arith.constant 0 : i32
    %c0_i32_0 = arith.constant 0 : i32
    %c0_i32_1 = arith.constant 0 : i32
    return %c0_i32, %c0_i32_0 : i32, i32
  }
  func.func @transform_2(%arg0: i32) -> (i32, i32) {
    %c0_i32 = arith.constant 0 : i32
    %c0_i32_0 = arith.constant 0 : i32
    %c0_i32_1 = arith.constant 0 : i32
    return %c0_i32, %c0_i32_0 : i32, i32
  }
  func.func @transform_3(%arg0: i32) -> (i32, i32) {
    %c0_i32 = arith.constant 0 : i32
    %c0_i32_0 = arith.constant 0 : i32
    %c0_i32_1 = arith.constant 0 : i32
    return %c0_i32, %c0_i32_0 : i32, i32
  }
  func.func @transform_4(%arg0: i32) -> (i32, i32) {
    %c0_i32 = arith.constant 0 : i32
    %c0_i32_0 = arith.constant 0 : i32
    %c0_i32_1 = arith.constant 0 : i32
    return %c0_i32, %c0_i32_0 : i32, i32
  }
  func.func @transform_5(%arg0: i32) -> (i32, i32) {
    %c0_i32 = arith.constant 0 : i32
    %c0_i32_0 = arith.constant 0 : i32
    %c0_i32_1 = arith.constant 0 : i32
    return %c0_i32, %c0_i32_0 : i32, i32
  }
  func.func @transform_6(%arg0: i32) -> (i32, i32) {
    %c0_i32 = arith.constant 0 : i32
    %c0_i32_0 = arith.constant 0 : i32
    %c0_i32_1 = arith.constant 0 : i32
    return %c0_i32, %c0_i32_0 : i32, i32
  }
  func.func @transform_7(%arg0: i32) -> (i32, i32, i32) {
    %c0_i32 = arith.constant 0 : i32
    %c0_i32_0 = arith.constant 0 : i32
    %c0_i32_1 = arith.constant 0 : i32
    return %arg0, %c0_i32, %c0_i32_0 : i32, i32, i32
  }
}

</mosaic_0001>

<llo_original>
// kernel: tpu_custom_call.1
$region0: #{tpu_custom_call.1}
  #allocation0 [shape = 'u32[]', space=smem, size = 0x4, offset = 0x4, fixed_abs, tag = 'smem constant byte address 0x4 - core index']
  #allocation1 [shape = 'u32[144,128]{1,0:T(1,128)}', space=vmem, size = 0x12000, scoped, tag = 'internal scratch']
  %s0 = inlined_call_operand.vmem [shape: bf16[128,16], index: 0, kind: input, shape index: {}]
  %s1 = inlined_call_operand.vmem [shape: bf16[16,32], index: 1, kind: input, shape index: {}]
  %s2 = inlined_call_operand.vmem [shape: f32[1,32], index: 2, kind: input, shape index: {}]
  %s3 = inlined_call_operand.vmem [shape: bf16[32,32], index: 3, kind: input, shape index: {}]
  %s4 = inlined_call_operand.vmem [shape: f32[1,32], index: 4, kind: input, shape index: {}]
  %s5 = inlined_call_operand.vmem [shape: bf16[32,128], index: 5, kind: input, shape index: {}]
  %s6 = inlined_call_operand.vmem [shape: f32[1,128], index: 6, kind: input, shape index: {}]
  %s7 = inlined_call_operand.hbm [shape: f32[1,1,128], index: 7, kind: output, shape index: {}]
  %s8 = sld [smem:[#allocation0]]
  $region38: #{tpu_custom_call.1} parent=0
    _
  %s10 = ssub.s32 1, %s8
  %s11 = scalar_select 0, %s10, %s8
  $region1: #{tpu_custom_call.1} parent=0
    #allocation2 [shape = 'u8[512]{0}', space=vmem, size = 0x400, scoped, tag = 'output window, operand 0, single buffered']
    #allocation3 [shape = 's32[1]{0}', space=sflag, size = 0x4, scoped, tag = 'scoped memory for tpu_custom_call.1']
    %12 = vsyncpa [#allocation3], 0
    // Predicated region
    $region2: #{tpu_custom_call.1} parent=1 // pred_check
      _
    $region3: #{tpu_custom_call.1} parent=1 // pred_check_branch
      %14 = sbr.rel (0) target = $region5
    $region4: #{tpu_custom_call.1} parent=1 // pred_region
      _
    $region5: #{tpu_custom_call.1} parent=1 // pred_fallthru
      _
    // Predicated region
    $region6: #{tpu_custom_call.1} parent=1 // pred_check
      _
    $region7: #{tpu_custom_call.1} parent=1 // pred_check_branch
      %16 = sbr.rel (0) target = $region9
    $region8: #{tpu_custom_call.1} parent=1 // pred_region
      _
    $region9: #{tpu_custom_call.1} parent=1 // pred_fallthru
      _
    // Predicated region
    $region10: #{tpu_custom_call.1} parent=1 // pred_check
      _
    $region11: #{tpu_custom_call.1} parent=1 // pred_check_branch
      %18 = sbr.rel (0) target = $region13
    $region12: #{tpu_custom_call.1} parent=1 // pred_region
      _
    $region13: #{tpu_custom_call.1} parent=1 // pred_fallthru
      _
    // Predicated region
    $region14: #{tpu_custom_call.1} parent=1 // pred_check
      _
    $region15: #{tpu_custom_call.1} parent=1 // pred_check_branch
      %20 = sbr.rel (0) target = $region17
    $region16: #{tpu_custom_call.1} parent=1 // pred_region
      _
    $region17: #{tpu_custom_call.1} parent=1 // pred_fallthru
      _
    // Predicated region
    $region18: #{tpu_custom_call.1} parent=1 // pred_check
      _
    $region19: #{tpu_custom_call.1} parent=1 // pred_check_branch
      %22 = sbr.rel (0) target = $region21
    $region20: #{tpu_custom_call.1} parent=1 // pred_region
      _
    $region21: #{tpu_custom_call.1} parent=1 // pred_fallthru
      _
    // Predicated region
    $region22: #{tpu_custom_call.1} parent=1 // pred_check
      _
    $region23: #{tpu_custom_call.1} parent=1 // pred_check_branch
      %24 = sbr.rel (0) target = $region25
    $region24: #{tpu_custom_call.1} parent=1 // pred_region
      _
    $region25: #{tpu_custom_call.1} parent=1 // pred_fallthru
      _
    // Predicated region
    $region26: #{tpu_custom_call.1} parent=1 // pred_check
      _
    $region27: #{tpu_custom_call.1} parent=1 // pred_check_branch
      %26 = sbr.rel (0) target = $region29
    $region28: #{tpu_custom_call.1} parent=1 // pred_region
      _
    $region29: #{tpu_custom_call.1} parent=1 // pred_fallthru
      _
    %v28 = vld [vmem:[%s0] sm:$0xf]
    %v29 = vld [vmem:[%s0 + $0x4] sm:$0xf]
    %v30 = vld [vmem:[%s0 + $0x8] sm:$0xf]
    %v31 = vld [vmem:[%s0 + $0xc] sm:$0xf]
    %v32 = vld [vmem:[%s0 + $0x10] sm:$0xf]
    %v33 = vld [vmem:[%s0 + $0x14] sm:$0xf]
    %v34 = vld [vmem:[%s0 + $0x18] sm:$0xf]
    %v35 = vld [vmem:[%s0 + $0x1c] sm:$0xf]
    %v36 = vld [vmem:[%s0 + $0x20] sm:$0xf]
    %v37 = vld [vmem:[%s0 + $0x24] sm:$0xf]
    %v38 = vld [vmem:[%s0 + $0x28] sm:$0xf]
    %v39 = vld [vmem:[%s0 + $0x2c] sm:$0xf]
    %v40 = vld [vmem:[%s0 + $0x30] sm:$0xf]
    %v41 = vld [vmem:[%s0 + $0x34] sm:$0xf]
    %v42 = vld [vmem:[%s0 + $0x38] sm:$0xf]
    %v43 = vld [vmem:[%s0 + $0x3c] sm:$0xf]
    %v44 = vld [vmem:[%s1] sm:$0xf]
    %v45 = vld [vmem:[%s1 + $0x4] sm:$0xf]
    %v46 = vld [vmem:[%s2] sm:$0x1]
    %v48 = vlaneseq
    %v49 = vshrl.u32 %v48, 7
    %v50 = vsub.s32 0, %v49
    %v51 = vrot.slane %v46, %v50
    %v69 = vunpack.c.l.b16 %v28
    %v70 = vunpack.c.l.b16 %v29
    %v71 = vunpack.c.l.b16 %v30
    %v72 = vunpack.c.l.b16 %v31
    %v73 = vunpack.c.l.b16 %v32
    %v74 = vunpack.c.l.b16 %v33
    %v75 = vunpack.c.l.b16 %v34
    %v76 = vunpack.c.l.b16 %v35
    %v77 = vunpack.c.l.b16 %v36
    %v78 = vunpack.c.l.b16 %v37
    %v79 = vunpack.c.l.b16 %v38
    %v80 = vunpack.c.l.b16 %v39
    %v81 = vunpack.c.l.b16 %v40
    %v82 = vunpack.c.l.b16 %v41
    %v83 = vunpack.c.l.b16 %v42
    %v84 = vunpack.c.l.b16 %v43
    %v85 = vpack.c.b16 %v70, %v69
    %v86 = vpack.c.b16 %v72, %v71
    %v87 = vpack.c.b16 %v74, %v73
    %v88 = vpack.c.b16 %v76, %v75
    %v89 = vpack.c.b16 %v78, %v77
    %v90 = vpack.c.b16 %v80, %v79
    %v91 = vpack.c.b16 %v82, %v81
    %v92 = vpack.c.b16 %v84, %v83
    %v95 = vunpack.c.l.b16 %v44
    %v96 = vunpack.c.l.b16 %v45
    %v97 = vpack.c.b16 %v96, %v95
    %vm99 = vcmask 130048
    %v101 = vsel %vm99, %v85, 0
    %v104 = vsel %vm99, %v86, 0
    %v107 = vsel %vm99, %v87, 0
    %v110 = vsel %vm99, %v88, 0
    %v113 = vsel %vm99, %v89, 0
    %v116 = vsel %vm99, %v90, 0
    %v119 = vsel %vm99, %v91, 0
    %v122 = vsel %vm99, %v92, 0
    %124 = vmatprep.subr.bf16.mxu0 0
    %125 = vmatpush1.bf16.msra.mxu0 %v97
    %126 = vmatprep.subr.bf16.mxu0 0
    %127 = vmatpush1.bf16.msra.mxu0 0
    %128 = vmatprep.subr.bf16.mxu0 0
    %129 = vmatpush1.bf16.msra.mxu0 0
    %130 = vmatprep.subr.bf16.mxu0 0
    %131 = vmatpush1.bf16.msra.mxu0 0
    %132 = vmatprep.subr.bf16.mxu0 0
    %133 = vmatpush1.bf16.msra.mxu0 0
    %134 = vmatprep.subr.bf16.mxu0 0
    %135 = vmatpush1.bf16.msra.mxu0 0
    %136 = vmatprep.subr.bf16.mxu0 0
    %137 = vmatpush1.bf16.msra.mxu0 0
    %138 = vmatprep.subr.bf16.mxu0 0
    %139 = vmatpush1.bf16.msra.mxu0 0
    %140 = vmatprep.subr.bf16.mxu0 0
    %141 = vmatpush1.bf16.msra.mxu0 0
    %142 = vmatprep.subr.bf16.mxu0 0
    %143 = vmatpush1.bf16.msra.mxu0 0
    %144 = vmatprep.subr.bf16.mxu0 0
    %145 = vmatpush1.bf16.msra.mxu0 0
    %146 = vmatprep.subr.bf16.mxu0 0
    %147 = vmatpush1.bf16.msra.mxu0 0
    %148 = vmatprep.subr.bf16.mxu0 0
    %149 = vmatpush1.bf16.msra.mxu0 0
    %150 = vmatprep.subr.bf16.mxu0 0
    %151 = vmatpush1.bf16.msra.mxu0 0
    %152 = vmatprep.subr.bf16.mxu0 0
    %153 = vmatpush1.bf16.msra.mxu0 0
    %154 = vmatprep.subr.bf16.mxu0 0
    %155 = vmatpush1.bf16.msra.mxu0 0
    %156 = vmatprep.mubr.bf16.mxu0 0
    %157 = vmatmul.mubr.bf16.gmra.mrb[0].mxu0 %v101
    %v158 = vpop.f32.mrb[0].mxu0
    %v159 = vadd.f32 %v51, %v158
    %v160 = vpop.f32.mrb[0].mxu0
    %v161 = vpop.f32.mrb[0].mxu0
    %v162 = vadd.f32 %v51, %v161
    %v163 = vpop.f32.mrb[0].mxu0
    %164 = vmatprep.mubr.bf16.mxu0 0
    %165 = vmatmul.mubr.bf16.gmra.mrb[0].mxu0 %v104
    %v166 = vpop.f32.mrb[0].mxu0
    %v167 = vadd.f32 %v51, %v166
    %v168 = vpop.f32.mrb[0].mxu0
    %v169 = vpop.f32.mrb[0].mxu0
    %v170 = vadd.f32 %v51, %v169
    %v171 = vpop.f32.mrb[0].mxu0
    %172 = vmatprep.mubr.bf16.mxu0 0
    %173 = vmatmul.mubr.bf16.gmra.mrb[0].mxu0 %v107
    %v174 = vpop.f32.mrb[0].mxu0
    %v175 = vadd.f32 %v51, %v174
    %v176 = vpop.f32.mrb[0].mxu0
    %v177 = vpop.f32.mrb[0].mxu0
    %v178 = vadd.f32 %v51, %v177
    %v179 = vpop.f32.mrb[0].mxu0
    %180 = vmatprep.mubr.bf16.mxu0 0
    %181 = vmatmul.mubr.bf16.gmra.mrb[0].mxu0 %v110
    %v182 = vpop.f32.mrb[0].mxu0
    %v183 = vadd.f32 %v51, %v182
    %v184 = vpop.f32.mrb[0].mxu0
    %v185 = vpop.f32.mrb[0].mxu0
    %v186 = vadd.f32 %v51, %v185
    %v187 = vpop.f32.mrb[0].mxu0
    %188 = vmatprep.mubr.bf16.mxu0 0
    %189 = vmatmul.mubr.bf16.gmra.mrb[0].mxu0 %v113
    %v190 = vpop.f32.mrb[0].mxu0
    %v191 = vadd.f32 %v51, %v190
    %v192 = vpop.f32.mrb[0].mxu0
    %v193 = vpop.f32.mrb[0].mxu0
    %v194 = vadd.f32 %v51, %v193
    %v195 = vpop.f32.mrb[0].mxu0
    %196 = vmatprep.mubr.bf16.mxu0 0
    %197 = vmatmul.mubr.bf16.gmra.mrb[0].mxu0 %v116
    %v198 = vpop.f32.mrb[0].mxu0
    %v199 = vadd.f32 %v51, %v198
    %v200 = vpop.f32.mrb[0].mxu0
    %v201 = vpop.f32.mrb[0].mxu0
    %v202 = vadd.f32 %v51, %v201
    %v203 = vpop.f32.mrb[0].mxu0
    %204 = vmatprep.mubr.bf16.mxu0 0
    %205 = vmatmul.mubr.bf16.gmra.mrb[0].mxu0 %v119
    %v206 = vpop.f32.mrb[0].mxu0
    %v207 = vadd.f32 %v51, %v206
    %v208 = vpop.f32.mrb[0].mxu0
    %v209 = vpop.f32.mrb[0].mxu0
    %v210 = vadd.f32 %v51, %v209
    %v211 = vpop.f32.mrb[0].mxu0
    %212 = vmatprep.mubr.bf16.mxu0 0
    %213 = vmatmul.mubr.bf16.gmra.mrb[0].mxu0 %v122
    %v214 = vpop.f32.mrb[0].mxu0
    %v215 = vadd.f32 %v51, %v214
    %v216 = vpop.f32.mrb[0].mxu0
    %v217 = vpop.f32.mrb[0].mxu0
    %v218 = vadd.f32 %v51, %v217
    %v219 = vpop.f32.mrb[0].mxu0
    %220 = vdwg.mxu0
    %v221 = vmul.f32 %v159, 0.01
    %v222 = vmul.f32 %v162, 0.01
    %v223 = vmul.f32 %v167, 0.01
    %v224 = vmul.f32 %v170, 0.01
    %v225 = vmul.f32 %v175, 0.01
    %v226 = vmul.f32 %v178, 0.01
    %v227 = vmul.f32 %v183, 0.01
    %v228 = vmul.f32 %v186, 0.01
    %v229 = vmul.f32 %v191, 0.01
    %v230 = vmul.f32 %v194, 0.01
    %v231 = vmul.f32 %v199, 0.01
    %v232 = vmul.f32 %v202, 0.01
    %v233 = vmul.f32 %v207, 0.01
    %v234 = vmul.f32 %v210, 0.01
    %v235 = vmul.f32 %v215, 0.01
    %v236 = vmul.f32 %v218, 0.01
    %v237 = vmax.f32 %v159, %v221
    %v238 = vmax.f32 %v162, %v222
    %v239 = vmax.f32 %v167, %v223
    %v240 = vmax.f32 %v170, %v224
    %v241 = vmax.f32 %v175, %v225
    %v242 = vmax.f32 %v178, %v226
    %v243 = vmax.f32 %v183, %v227
    %v244 = vmax.f32 %v186, %v228
    %v245 = vmax.f32 %v191, %v229
    %v246 = vmax.f32 %v194, %v230
    %v247 = vmax.f32 %v199, %v231
    %v248 = vmax.f32 %v202, %v232
    %v249 = vmax.f32 %v207, %v233
    %v250 = vmax.f32 %v210, %v234
    %v251 = vmax.f32 %v215, %v235
    %v252 = vmax.f32 %v218, %v236
    %v253 = vpack.c.bf16 %v238, %v237
    %v254 = vpack.c.bf16 %v240, %v239
    %v255 = vpack.c.bf16 %v242, %v241
    %v256 = vpack.c.bf16 %v244, %v243
    %v257 = vpack.c.bf16 %v246, %v245
    %v258 = vpack.c.bf16 %v248, %v247
    %v259 = vpack.c.bf16 %v250, %v249
    %v260 = vpack.c.bf16 %v252, %v251
    %v261 = vld [vmem:[%s3] sm:$0xf]
    %v262 = vld [vmem:[%s3 + $0x4] sm:$0xf]
    %v263 = vld [vmem:[%s3 + $0x8] sm:$0xf]
    %v264 = vld [vmem:[%s3 + $0xc] sm:$0xf]
    %v265 = vld [vmem:[%s4] sm:$0x1]
    %v267 = vlaneseq
    %v268 = vshrl.u32 %v267, 7
    %v269 = vsub.s32 0, %v268
    %v270 = vrot.slane %v265, %v269
    %v276 = vunpack.c.l.b16 %v261
    %v277 = vunpack.c.l.b16 %v262
    %v278 = vunpack.c.l.b16 %v263
    %v279 = vunpack.c.l.b16 %v264
    %v280 = vpack.c.b16 %v277, %v276
    %v281 = vpack.c.b16 %v279, %v278
    %vm284 = vcmask 261120
    %v286 = vsel %vm284, %v253, 0
    %v289 = vsel %vm284, %v254, 0
    %v292 = vsel %vm284, %v255, 0
    %v295 = vsel %vm284, %v256, 0
    %v298 = vsel %vm284, %v257, 0
    %v301 = vsel %vm284, %v258, 0
    %v304 = vsel %vm284, %v259, 0
    %v307 = vsel %vm284, %v260, 0
    %309 = vmatprep.subr.bf16.mxu0 0
    %310 = vmatpush1.bf16.msra.mxu0 %v280
    %311 = vmatprep.subr.bf16.mxu0 0
    %312 = vmatpush1.bf16.msra.mxu0 %v281
    %313 = vmatprep.subr.bf16.mxu0 0
    %314 = vmatpush1.bf16.msra.mxu0 0
    %315 = vmatprep.subr.bf16.mxu0 0
    %316 = vmatpush1.bf16.msra.mxu0 0
    %317 = vmatprep.subr.bf16.mxu0 0
    %318 = vmatpush1.bf16.msra.mxu0 0
    %319 = vmatprep.subr.bf16.mxu0 0
    %320 = vmatpush1.bf16.msra.mxu0 0
    %321 = vmatprep.subr.bf16.mxu0 0
    %322 = vmatpush1.bf16.msra.mxu0 0
    %323 = vmatprep.subr.bf16.mxu0 0
    %324 = vmatpush1.bf16.msra.mxu0 0
    %325 = vmatprep.subr.bf16.mxu0 0
    %326 = vmatpush1.bf16.msra.mxu0 0
    %327 = vmatprep.subr.bf16.mxu0 0
    %328 = vmatpush1.bf16.msra.mxu0 0
    %329 = vmatprep.subr.bf16.mxu0 0
    %330 = vmatpush1.bf16.msra.mxu0 0
    %331 = vmatprep.subr.bf16.mxu0 0
    %332 = vmatpush1.bf16.msra.mxu0 0
    %333 = vmatprep.subr.bf16.mxu0 0
    %334 = vmatpush1.bf16.msra.mxu0 0
    %335 = vmatprep.subr.bf16.mxu0 0
    %336 = vmatpush1.bf16.msra.mxu0 0
    %337 = vmatprep.subr.bf16.mxu0 0
    %338 = vmatpush1.bf16.msra.mxu0 0
    %339 = vmatprep.subr.bf16.mxu0 0
    %340 = vmatpush1.bf16.msra.mxu0 0
    %341 = vmatprep.mubr.bf16.mxu0 0
    %342 = vmatmul.mubr.bf16.gmra.mrb[0].mxu0 %v286
    %v343 = vpop.f32.mrb[0].mxu0
    %v344 = vadd.f32 %v270, %v343
    %v345 = vpop.f32.mrb[0].mxu0
    %v346 = vpop.f32.mrb[0].mxu0
    %v347 = vadd.f32 %v270, %v346
    %v348 = vpop.f32.mrb[0].mxu0
    %349 = vmatprep.mubr.bf16.mxu0 0
    %350 = vmatmul.mubr.bf16.gmra.mrb[0].mxu0 %v289
    %v351 = vpop.f32.mrb[0].mxu0
    %v352 = vadd.f32 %v270, %v351
    %v353 = vpop.f32.mrb[0].mxu0
    %v354 = vpop.f32.mrb[0].mxu0
    %v355 = vadd.f32 %v270, %v354
    %v356 = vpop.f32.mrb[0].mxu0
    %357 = vmatprep.mubr.bf16.mxu0 0
    %358 = vmatmul.mubr.bf16.gmra.mrb[0].mxu0 %v292
    %v359 = vpop.f32.mrb[0].mxu0
    %v360 = vadd.f32 %v270, %v359
    %v361 = vpop.f32.mrb[0].mxu0
    %v362 = vpop.f32.mrb[0].mxu0
    %v363 = vadd.f32 %v270, %v362
    %v364 = vpop.f32.mrb[0].mxu0
    %365 = vmatprep.mubr.bf16.mxu0 0
    %366 = vmatmul.mubr.bf16.gmra.mrb[0].mxu0 %v295
    %v367 = vpop.f32.mrb[0].mxu0
    %v368 = vadd.f32 %v270, %v367
    %v369 = vpop.f32.mrb[0].mxu0
    %v370 = vpop.f32.mrb[0].mxu0
    %v371 = vadd.f32 %v270, %v370
    %v372 = vpop.f32.mrb[0].mxu0
    %373 = vmatprep.mubr.bf16.mxu0 0
    %374 = vmatmul.mubr.bf16.gmra.mrb[0].mxu0 %v298
    %v375 = vpop.f32.mrb[0].mxu0
    %v376 = vadd.f32 %v270, %v375
    %v377 = vpop.f32.mrb[0].mxu0
    %v378 = vpop.f32.mrb[0].mxu0
    %v379 = vadd.f32 %v270, %v378
    %v380 = vpop.f32.mrb[0].mxu0
    %381 = vmatprep.mubr.bf16.mxu0 0
    %382 = vmatmul.mubr.bf16.gmra.mrb[0].mxu0 %v301
    %v383 = vpop.f32.mrb[0].mxu0
    %v384 = vadd.f32 %v270, %v383
    %v385 = vpop.f32.mrb[0].mxu0
    %v386 = vpop.f32.mrb[0].mxu0
    %v387 = vadd.f32 %v270, %v386
    %v388 = vpop.f32.mrb[0].mxu0
    %389 = vmatprep.mubr.bf16.mxu0 0
    %390 = vmatmul.mubr.bf16.gmra.mrb[0].mxu0 %v304
    %v391 = vpop.f32.mrb[0].mxu0
    %v392 = vadd.f32 %v270, %v391
    %v393 = vpop.f32.mrb[0].mxu0
    %v394 = vpop.f32.mrb[0].mxu0
    %v395 = vadd.f32 %v270, %v394
    %v396 = vpop.f32.mrb[0].mxu0
    %397 = vmatprep.mubr.bf16.mxu0 0
    %398 = vmatmul.mubr.bf16.gmra.mrb[0].mxu0 %v307
    %v399 = vpop.f32.mrb[0].mxu0
    %v400 = vadd.f32 %v270, %v399
    %v401 = vpop.f32.mrb[0].mxu0
    %v402 = vpop.f32.mrb[0].mxu0
    %v403 = vadd.f32 %v270, %v402
    %v404 = vpop.f32.mrb[0].mxu0
    %405 = vdwg.mxu0
    %v406 = vmul.f32 %v344, 0.01
    %v407 = vmul.f32 %v347, 0.01
    %v408 = vmul.f32 %v352, 0.01
    %v409 = vmul.f32 %v355, 0.01
    %v410 = vmul.f32 %v360, 0.01
    %v411 = vmul.f32 %v363, 0.01
    %v412 = vmul.f32 %v368, 0.01
    %v413 = vmul.f32 %v371, 0.01
    %v414 = vmul.f32 %v376, 0.01
    %v415 = vmul.f32 %v379, 0.01
    %v416 = vmul.f32 %v384, 0.01
    %v417 = vmul.f32 %v387, 0.01
    %v418 = vmul.f32 %v392, 0.01
    %v419 = vmul.f32 %v395, 0.01
    %v420 = vmul.f32 %v400, 0.01
    %v421 = vmul.f32 %v403, 0.01
    %v422 = vmax.f32 %v344, %v406
    %v423 = vmax.f32 %v347, %v407
    %v424 = vmax.f32 %v352, %v408
    %v425 = vmax.f32 %v355, %v409
    %v426 = vmax.f32 %v360, %v410
    %v427 = vmax.f32 %v363, %v411
    %v428 = vmax.f32 %v368, %v412
    %v429 = vmax.f32 %v371, %v413
    %v430 = vmax.f32 %v376, %v414
    %v431 = vmax.f32 %v379, %v415
    %v432 = vmax.f32 %v384, %v416
    %v433 = vmax.f32 %v387, %v417
    %v434 = vmax.f32 %v392, %v418
    %v435 = vmax.f32 %v395, %v419
    %v436 = vmax.f32 %v400, %v420
    %v437 = vmax.f32 %v403, %v421
    %v438 = vpack.c.bf16 %v423, %v422
    %v439 = vpack.c.bf16 %v425, %v424
    %v440 = vpack.c.bf16 %v427, %v426
    %v441 = vpack.c.bf16 %v429, %v428
    %v442 = vpack.c.bf16 %v431, %v430
    %v443 = vpack.c.bf16 %v433, %v432
    %v444 = vpack.c.bf16 %v435, %v434
    %v445 = vpack.c.bf16 %v437, %v436
    %v446 = vld [vmem:[%s5] sm:$0xf]
    %v447 = vld [vmem:[%s5 + $0x4] sm:$0xf]
    %v448 = vld [vmem:[%s5 + $0x8] sm:$0xf]
    %v449 = vld [vmem:[%s5 + $0xc] sm:$0xf]
    %v450 = vld [vmem:[%s6] sm:$0x1]
    %v452 = vlaneseq
    %v453 = vshrl.u32 %v452, 7
    %v454 = vsub.s32 0, %v453
    %v455 = vrot.slane %v450, %v454
    %v461 = vunpack.c.l.b16 %v446
    %v462 = vunpack.c.l.b16 %v447
    %v463 = vunpack.c.l.b16 %v448
    %v464 = vunpack.c.l.b16 %v449
    %v465 = vpack.c.b16 %v462, %v461
    %v466 = vpack.c.b16 %v464, %v463
    %v470 = vsel %vm284, %v438, 0
    %v473 = vsel %vm284, %v439, 0
    %v476 = vsel %vm284, %v440, 0
    %v479 = vsel %vm284, %v441, 0
    %v482 = vsel %vm284, %v442, 0
    %v485 = vsel %vm284, %v443, 0
    %v488 = vsel %vm284, %v444, 0
    %v491 = vsel %vm284, %v445, 0
    %493 = vmatprep.subr.bf16.mxu0 0
    %494 = vmatpush1.bf16.msra.mxu0 %v465
    %495 = vmatprep.subr.bf16.mxu0 0
    %496 = vmatpush1.bf16.msra.mxu0 %v466
    %497 = vmatprep.subr.bf16.mxu0 0
    %498 = vmatpush1.bf16.msra.mxu0 0
    %499 = vmatprep.subr.bf16.mxu0 0
    %500 = vmatpush1.bf16.msra.mxu0 0
    %501 = vmatprep.subr.bf16.mxu0 0
    %502 = vmatpush1.bf16.msra.mxu0 0
    %503 = vmatprep.subr.bf16.mxu0 0
    %504 = vmatpush1.bf16.msra.mxu0 0
    %505 = vmatprep.subr.bf16.mxu0 0
    %506 = vmatpush1.bf16.msra.mxu0 0
    %507 = vmatprep.subr.bf16.mxu0 0
    %508 = vmatpush1.bf16.msra.mxu0 0
    %509 = vmatprep.subr.bf16.mxu0 0
    %510 = vmatpush1.bf16.msra.mxu0 0
    %511 = vmatprep.subr.bf16.mxu0 0
    %512 = vmatpush1.bf16.msra.mxu0 0
    %513 = vmatprep.subr.bf16.mxu0 0
    %514 = vmatpush1.bf16.msra.mxu0 0
    %515 = vmatprep.subr.bf16.mxu0 0
    %516 = vmatpush1.bf16.msra.mxu0 0
    %517 = vmatprep.subr.bf16.mxu0 0
    %518 = vmatpush1.bf16.msra.mxu0 0
    %519 = vmatprep.subr.bf16.mxu0 0
    %520 = vmatpush1.bf16.msra.mxu0 0
    %521 = vmatprep.subr.bf16.mxu0 0
    %522 = vmatpush1.bf16.msra.mxu0 0
    %523 = vmatprep.subr.bf16.mxu0 0
    %524 = vmatpush1.bf16.msra.mxu0 0
    %525 = vmatprep.mubr.bf16.mxu0 0
    %526 = vmatmul.mubr.bf16.gmra.mrb[0].mxu0 %v470
    %v527 = vpop.f32.mrb[0].mxu0
    %v528 = vadd.f32 %v455, %v527
    %v529 = vpop.f32.mrb[0].mxu0
    %v530 = vpop.f32.mrb[0].mxu0
    %v531 = vadd.f32 %v455, %v530
    %v532 = vpop.f32.mrb[0].mxu0
    %533 = vmatprep.mubr.bf16.mxu0 0
    %534 = vmatmul.mubr.bf16.gmra.mrb[0].mxu0 %v473
    %v535 = vpop.f32.mrb[0].mxu0
    %v536 = vadd.f32 %v455, %v535
    %v537 = vpop.f32.mrb[0].mxu0
    %v538 = vpop.f32.mrb[0].mxu0
    %v539 = vadd.f32 %v455, %v538
    %v540 = vpop.f32.mrb[0].mxu0
    %541 = vmatprep.mubr.bf16.mxu0 0
    %542 = vmatmul.mubr.bf16.gmra.mrb[0].mxu0 %v476
    %v543 = vpop.f32.mrb[0].mxu0
    %v544 = vadd.f32 %v455, %v543
    %v545 = vpop.f32.mrb[0].mxu0
    %v546 = vpop.f32.mrb[0].mxu0
    %v547 = vadd.f32 %v455, %v546
    %v548 = vpop.f32.mrb[0].mxu0
    %549 = vmatprep.mubr.bf16.mxu0 0
    %550 = vmatmul.mubr.bf16.gmra.mrb[0].mxu0 %v479
    %v551 = vpop.f32.mrb[0].mxu0
    %v552 = vadd.f32 %v455, %v551
    %v553 = vpop.f32.mrb[0].mxu0
    %v554 = vpop.f32.mrb[0].mxu0
    %v555 = vadd.f32 %v455, %v554
    %v556 = vpop.f32.mrb[0].mxu0
    %557 = vmatprep.mubr.bf16.mxu0 0
    %558 = vmatmul.mubr.bf16.gmra.mrb[0].mxu0 %v482
    %v559 = vpop.f32.mrb[0].mxu0
    %v560 = vadd.f32 %v455, %v559
    %v561 = vpop.f32.mrb[0].mxu0
    %v562 = vpop.f32.mrb[0].mxu0
    %v563 = vadd.f32 %v455, %v562
    %v564 = vpop.f32.mrb[0].mxu0
    %565 = vmatprep.mubr.bf16.mxu0 0
    %566 = vmatmul.mubr.bf16.gmra.mrb[0].mxu0 %v485
    %v567 = vpop.f32.mrb[0].mxu0
    %v568 = vadd.f32 %v455, %v567
    %v569 = vpop.f32.mrb[0].mxu0
    %v570 = vpop.f32.mrb[0].mxu0
    %v571 = vadd.f32 %v455, %v570
    %v572 = vpop.f32.mrb[0].mxu0
    %573 = vmatprep.mubr.bf16.mxu0 0
    %574 = vmatmul.mubr.bf16.gmra.mrb[0].mxu0 %v488
    %v575 = vpop.f32.mrb[0].mxu0
    %v576 = vadd.f32 %v455, %v575
    %v577 = vpop.f32.mrb[0].mxu0
    %v578 = vpop.f32.mrb[0].mxu0
    %v579 = vadd.f32 %v455, %v578
    %v580 = vpop.f32.mrb[0].mxu0
    %581 = vmatprep.mubr.bf16.mxu0 0
    %582 = vmatmul.mubr.bf16.gmra.mrb[0].mxu0 %v491
    %v583 = vpop.f32.mrb[0].mxu0
    %v584 = vadd.f32 %v455, %v583
    %v585 = vpop.f32.mrb[0].mxu0
    %v586 = vpop.f32.mrb[0].mxu0
    %v587 = vadd.f32 %v455, %v586
    %v588 = vpop.f32.mrb[0].mxu0
    %589 = vdwg.mxu0
    %590 = vxpose.xlu0.b32.start [1/16] %v528, 128
    %591 = vxpose.xlu0.b32.cont [2/16] %v531, 128
    %592 = vxpose.xlu0.b32.cont [3/16] %v536, 128
    %593 = vxpose.xlu0.b32.cont [4/16] %v539, 128
    %594 = vxpose.xlu0.b32.cont [5/16] %v544, 128
    %595 = vxpose.xlu0.b32.cont [6/16] %v547, 128
    %596 = vxpose.xlu0.b32.cont [7/16] %v552, 128
    %597 = vxpose.xlu0.b32.cont [8/16] %v555, 128
    %598 = vxpose.xlu0.b32.cont [9/16] %v560, 128
    %599 = vxpose.xlu0.b32.cont [10/16] %v563, 128
    %600 = vxpose.xlu0.b32.cont [11/16] %v568, 128
    %601 = vxpose.xlu0.b32.cont [12/16] %v571, 128
    %602 = vxpose.xlu0.b32.cont [13/16] %v576, 128
    %603 = vxpose.xlu0.b32.cont [14/16] %v579, 128
    %604 = vxpose.xlu0.b32.cont [15/16] %v584, 128
    %605 = vxpose.xlu0.b32.end [16/16] %v587, 128
    %v606 = vpop.trf.xlu0
    %v607 = vpop.trf.xlu0
    %v608 = vpop.trf.xlu0
    %v609 = vpop.trf.xlu0
    %v610 = vpop.trf.xlu0
    %v611 = vpop.trf.xlu0
    %v612 = vpop.trf.xlu0
    %v613 = vpop.trf.xlu0
    %v614 = vpop.trf.xlu0
    %v615 = vpop.trf.xlu0
    %v616 = vpop.trf.xlu0
    %v617 = vpop.trf.xlu0
    %v618 = vpop.trf.xlu0
    %v619 = vpop.trf.xlu0
    %v620 = vpop.trf.xlu0
    %v621 = vpop.trf.xlu0
    %v622 = vsub.f32 0.0, %v606
    %v623 = vmul.f32 %v622, 1.442695
    %v624 = vpow.pop %v623
    %v625 = vadd.f32 %v624, 1.0
    %v626 = vrcp.pop %v625
    %627 = vst [vmem:[#allocation2] sm:$0x1] %v626
    // Predicated region
    $region30: #{tpu_custom_call.1} parent=1 // pred_check
      _
    $region31: #{tpu_custom_call.1} parent=1 // pred_check_branch
      %629 = sbr.rel (0) target = $region33
    $region32: #{tpu_custom_call.1} parent=1 // pred_region
      %s631 = ssub.s32 16, 16
      %632 = vsyncadd [#allocation3], %s631
      %s634 = sshll.u32 [#allocation2], 4
      %s635 = int_to_ptr.vmem [resolvable:$true] %s634
      %637 = dma.vmem_to_hbm [thread:$0]  %s635, 16, %s7, [#allocation3]
    $region33: #{tpu_custom_call.1} parent=1 // pred_fallthru
      _
    // Predicated region
    $region34: #{tpu_custom_call.1} parent=1 // pred_check
      _
    $region35: #{tpu_custom_call.1} parent=1 // pred_check_branch
      %639 = sbr.rel (0) target = $region37
    $region36: #{tpu_custom_call.1} parent=1 // pred_region
      %640 = dma.done [#allocation3], 16
    $region37: #{tpu_custom_call.1} parent=1 // pred_fallthru
      _
    %641 = vsyncpa [#allocation3], 1

</llo_original>
